<compile_context>
chip_gen: v7x
topology: tpu7x:2x2x1
jax: 0.10.0
libtpu: 0.0.40
codegen_flags: <defaults>
</compile_context>

<pallas_src>
import math

import jax
import jax.numpy as jnp
from jax.experimental import pallas as pl
from jax.experimental.pallas import tpu as pltpu

GN_EPS = 1e-6            # nn.GroupNorm(32, C, eps=1e-06)
LN_EPS = 1e-5            # nn.LayerNorm default eps
GN_GROUPS = 32
MATMUL_DTYPE = jnp.bfloat16   # MXU operand dtype; accumulation stays f32
_INV_SQRT2 = 1.0 / math.sqrt(2.0)


def _layer_norm(v, g, b):
    # One-pass formulation: no serial dependency between the two reductions and
    # no extra (TILE_HW, C) subtract+square pass (3 LNs per tile).
    mu = jnp.mean(v, axis=-1, keepdims=True)
    var = jnp.mean(v * v, axis=-1, keepdims=True) - mu * mu
    return (v - mu) * jax.lax.rsqrt(var + LN_EPS) * g + b


# ---------------------------------------------------------------------------
# Kernel 1: GroupNorm statistics, folded with the GN affine.
#   grid = (N, HW // TILE_STATS); axis 1 is a reduction ("arbitrary").
#   Outputs per-batch scale_c / bias_c of shape (N, 1, C) so the main kernel
#   applies GroupNorm as a single fused multiply-add per element.
# ---------------------------------------------------------------------------
def gn_stats_kernel(x_ref, gmat_ref, gmat_t_ref, gn_g_ref, gn_b_ref,
                    scale_ref, bias_ref, sum_sc, sumsq_sc):
    j = pl.program_id(1)

    @pl.when(j == 0)
    def _():
        sum_sc[...] = jnp.zeros_like(sum_sc)
        sumsq_sc[...] = jnp.zeros_like(sumsq_sc)

    x = x_ref[0]                                        # (TILE_STATS, C) f32
    sum_sc[...] += jnp.sum(x, axis=0, keepdims=True)
    sumsq_sc[...] += jnp.sum(x * x, axis=0, keepdims=True)

    @pl.when(j == pl.num_programs(1) - 1)
    def _():
        gmat = gmat_ref[...]                            # (C, G) one-hot channel->group
        gmat_t = gmat_t_ref[...]                        # (G, C)
        c, g = gmat.shape
        hw_total = x_ref.shape[1] * pl.num_programs(1)
        group_elems = hw_total * (c // g)               # elements per GN group
        grp_sum = jnp.dot(sum_sc[...], gmat, preferred_element_type=jnp.float32)
        grp_sum2 = jnp.dot(sumsq_sc[...], gmat, preferred_element_type=jnp.float32)
        mean_g = grp_sum / group_elems
        var_g = grp_sum2 / group_elems - mean_g * mean_g
        inv_g = jax.lax.rsqrt(var_g + GN_EPS)
        mean_c = jnp.dot(mean_g, gmat_t, preferred_element_type=jnp.float32)  # (1, C)
        inv_c = jnp.dot(inv_g, gmat_t, preferred_element_type=jnp.float32)    # (1, C)
        scale = gn_g_ref[...] * inv_c                   # folded GN affine
        bias = gn_b_ref[...] - mean_c * scale
        scale_ref[0] = scale
        bias_ref[0] = bias


# ---------------------------------------------------------------------------
# Kernel 2: everything after the GroupNorm statistics, on one HW tile.
# The GeGLU hidden dim is processed in static chunks (bounds intermediates).
# ---------------------------------------------------------------------------
def _make_attn_kernel(chunk_bounds):
    def attn_block_kernel(x_ref, scale_ref, bias_ref,
                          wci_ref, bci_ref,
                          ln1g_ref, ln1b_ref, ln2g_ref, ln2b_ref,
                          ln3g_ref, ln3b_ref,
                          wga_ref, bga_ref, wgg_ref, bgg_ref,
                          wg2_ref, bg2_ref,
                          wco_ref, bco_ref,
                          out_ref):
        x = x_ref[0]                                    # (TILE_HW, C) f32

        # ---- GroupNorm with pre-folded affine: one FMA per element ----
        y = x * scale_ref[0] + bias_ref[0]

        # ---- conv_input: 1x1 conv == per-token channel matmul ----
        y = jnp.dot(y.astype(MATMUL_DTYPE), wci_ref[...],
                    preferred_element_type=jnp.float32) + bci_ref[...]

        # ---- blocks 1 & 2: LayerNorm + residual (attention outputs are
        #      discarded in the reference forward: no attention matmuls) ----
        y = _layer_norm(y, ln1g_ref[...], ln1b_ref[...]) + y
        y = _layer_norm(y, ln2g_ref[...], ln2b_ref[...]) + y

        # ---- block 3: LayerNorm + chunked GeGLU feed-forward + residual ----
        res = y
        t = _layer_norm(y, ln3g_ref[...], ln3b_ref[...]).astype(MATMUL_DTYPE)
        acc = None
        for (s, sz) in chunk_bounds:                    # static slices
            a = jnp.dot(t, wga_ref[:, s:s + sz],
                        preferred_element_type=jnp.float32) + bga_ref[:, s:s + sz]
            gate = jnp.dot(t, wgg_ref[:, s:s + sz],
                           preferred_element_type=jnp.float32) + bgg_ref[:, s:s + sz]
            gelu = 0.5 * gate * (1.0 + jax.lax.erf(gate * _INV_SQRT2))  # exact GELU, f32
            h = (a * gelu).astype(MATMUL_DTYPE)
            part = jnp.dot(h, wg2_ref[s:s + sz, :], preferred_element_type=jnp.float32)
            acc = part if acc is None else acc + part
        y = acc + bg2_ref[...] + res

        # ---- conv_output (1x1) + long residual (re-read resident input tile) ----
        out = jnp.dot(y.astype(MATMUL_DTYPE), wco_ref[...],
                      preferred_element_type=jnp.float32) + bco_ref[...]
        out_ref[0] = (out + x_ref[0]).astype(out_ref.dtype)

    return attn_block_kernel


# ---------------------------------------------------------------------------
# Spec / budget helpers
# ---------------------------------------------------------------------------
def _const_spec(shape):
    """Grid-invariant block: constant index_map, single-buffered."""
    rank = len(shape)
    idx = lambda i, j, _r=rank: (0,) * _r
    if hasattr(pl, "Buffered"):
        try:
            return pl.BlockSpec(shape, idx, pipeline_mode=pl.Buffered(1))
        except TypeError:       # older BlockSpec without pipeline_mode kwarg
            pass
    return pl.BlockSpec(shape, idx)


def _cost_kwargs(flops, transcendentals, bytes_accessed):
    if hasattr(pl, "CostEstimate"):
        try:
            return {"cost_estimate": pl.CostEstimate(
                flops=int(flops), transcendentals=int(transcendentals),
                bytes_accessed=int(bytes_accessed))}
        except TypeError:
            pass
    return {}


def _vmem_capacity_bytes():
    try:
        return int(pltpu.get_tpu_info().vmem_capacity_bytes)
    except Exception:
        return 128 * 1024 * 1024        # v5e / v6e physical VMEM fallback


def _pick_tile(hw, target):
    """Largest divisor of hw that is <= target and a multiple of 8."""
    t = min(target, hw)
    for cand in range(t, 7, -1):
        if hw % cand == 0 and cand % 8 == 0:
            return cand
    return hw


def _chunk_bounds(hidden, chunk):
    chunk = max(128, min(chunk, hidden))
    bounds, s = [], 0
    while s < hidden:
        sz = min(chunk, hidden - s)
        bounds.append((s, sz))
        s += sz
    return tuple(bounds)


def _vmem_limit_main(c, tile_hw, chunk, capacity):
    wb = jnp.dtype(MATMUL_DTYPE).itemsize
    weights = 14 * c * c * wb                       # conv in/out + geglu, single-buffered
    vectors = 32 * c * 4                            # LN / GN / bias row vectors
    io_tiles = 2 * 2 * tile_hw * c * 4              # x + out tiles, double-buffered
    interm = 6 * tile_hw * c * 4 + 4 * tile_hw * chunk * 4
    est = weights + vectors + io_tiles + interm
    cap = capacity * 3 // 4                         # ~25% headroom per generation
    return int(min(cap, max(32 << 20, int(est * 1.5))))


def _vmem_limit_stats(c, tile_stats, capacity):
    est = 2 * tile_stats * c * 4 + 4 * c * 4 + 2 * c * GN_GROUPS * 4
    cap = capacity * 3 // 4
    return int(min(cap, max(32 << 20, int(est * 2))))


# ---------------------------------------------------------------------------
# Entry points
# ---------------------------------------------------------------------------
def unet_attention_block_tokens(x_tok, context, params, *,
                                tile_hw=None, tile_hw_stats=None,
                                geglu_chunk=None, out_dtype=jnp.float32):
    """Core entry point: x_tok is (N, HW, C) float32, channels-last tokens."""
    # `context` accepted for API parity with the PyTorch forward, but unused:
    # the reference forward discards the cross-attention output.
    del context
    n, hw, c = x_tok.shape
    p = params
    capacity = _vmem_capacity_bytes()

    # Pass-2 tile: bigger for small C (memory-bound), smaller for huge C (VMEM).
    tile_hw = _pick_tile(hw, tile_hw if tile_hw is not None
                         else (512 if c <= 640 else 256))
    # Pass-1 tile: pure bandwidth, so make it as large as reasonable.
    tile_stats = _pick_tile(hw, tile_hw_stats if tile_hw_stats is not None else 2048)
    assert hw % tile_hw == 0 and hw % tile_stats == 0, (hw, tile_hw, tile_stats)
    n_tiles = hw // tile_hw
    n_tiles_stats = hw // tile_stats

    hidden = 4 * c
    chunk_bounds = _chunk_bounds(hidden, geglu_chunk if geglu_chunk is not None else 2048)
    max_chunk = max(sz for _, sz in chunk_bounds)

    x_tok = x_tok.astype(jnp.float32)

    # ---- pass 1: per-batch folded GroupNorm scale / bias ----
    scale_c, bias_c = pl.pallas_call(
        gn_stats_kernel,
        out_shape=(jax.ShapeDtypeStruct((n, 1, c), jnp.float32),
                   jax.ShapeDtypeStruct((n, 1, c), jnp.float32)),
        grid_spec=pltpu.PrefetchScalarGridSpec(
            num_scalar_prefetch=0,
            grid=(n, n_tiles_stats),
            in_specs=[pl.BlockSpec((1, tile_stats, c), lambda i, j: (i, j, 0)),
                      _const_spec(p["gmat"].shape),
                      _const_spec(p["gmat_t"].shape),
                      _const_spec(p["gn_g"].shape),
                      _const_spec(p["gn_b"].shape)],
            out_specs=[pl.BlockSpec((1, 1, c), lambda i, j: (i, 0, 0)),
                       pl.BlockSpec((1, 1, c), lambda i, j: (i, 0, 0))],
            scratch_shapes=[pltpu.VMEM((1, c), jnp.float32),
                            pltpu.VMEM((1, c), jnp.float32)]),
        compiler_params=pltpu.CompilerParams(
            dimension_semantics=("parallel", "arbitrary"),
            vmem_limit_bytes=_vmem_limit_stats(c, tile_stats, capacity)),
        **_cost_kwargs(flops=3 * n * hw * c,
                       transcendentals=n * GN_GROUPS,
                       bytes_accessed=n * hw * c * 4 + 2 * n * c * 4),
    )(x_tok, p["gmat"], p["gmat_t"], p["gn_g"], p["gn_b"])

    # ---- pass 2: token-parallel main kernel, tiled over (N, HW) ----
    order = ["w_conv_in", "b_conv_in",
             "ln1_g", "ln1_b", "ln2_g", "ln2_b", "ln3_g", "ln3_b",
             "w_geglu_a", "b_geglu_a", "w_geglu_gate", "b_geglu_gate",
             "w_geglu2", "b_geglu2",
             "w_conv_out", "b_conv_out"]
    in_specs = [pl.BlockSpec((1, tile_hw, c), lambda i, j: (i, j, 0)),
                pl.BlockSpec((1, 1, c), lambda i, j: (i, 0, 0)),
                pl.BlockSpec((1, 1, c), lambda i, j: (i, 0, 0))]
    in_specs += [_const_spec(p[k].shape) for k in order]

    wbytes = jnp.dtype(MATMUL_DTYPE).itemsize
    out_tok = pl.pallas_call(
        _make_attn_kernel(chunk_bounds),
        out_shape=jax.ShapeDtypeStruct((n, hw, c), out_dtype),
        grid_spec=pltpu.PrefetchScalarGridSpec(
            num_scalar_prefetch=0,
            grid=(n, n_tiles),
            in_specs=in_specs,
            out_specs=pl.BlockSpec((1, tile_hw, c), lambda i, j: (i, j, 0)),
        ),
        compiler_params=pltpu.CompilerParams(
            dimension_semantics=("parallel", "parallel"),
            vmem_limit_bytes=_vmem_limit_main(c, tile_hw, max_chunk, capacity)),
        **_cost_kwargs(flops=2 * n * hw * 14 * c * c,
                       transcendentals=n * hw * 4 * c,
                       bytes_accessed=2 * n * hw * c * 4 + 14 * c * c * wbytes),
    )(x_tok, scale_c, bias_c, *[p[k] for k in order])
    return out_tok


def unet_attention_block(x_nchw, context, params, **kw):
    """PyTorch-layout (NCHW) wrapper around the tokens-layout kernels.

    NOTE: the two transposes here are full HBM round trips of the activation;
    keep activations in tokens layout and call unet_attention_block_tokens
    directly when the surrounding model allows it."""
    n, c, h, w = x_nchw.shape
    x_tok = jnp.transpose(x_nchw.reshape(n, c, h * w), (0, 2, 1))
    out_tok = unet_attention_block_tokens(x_tok, context, params, **kw)
    return jnp.transpose(out_tok, (0, 2, 1)).reshape(n, c, h, w)


# ---------------------------------------------------------------------------
# Parameters & pure-JAX reference
# ---------------------------------------------------------------------------
def init_params(key, n_heads, n_embed):
    channels = n_heads * n_embed
    assert channels % GN_GROUPS == 0
    ks = jax.random.split(key, 18)

    def nrm(k, shape, scale=0.05):
        return scale * jax.random.normal(k, shape, jnp.float32)

    def wmat(k, shape):           # matmul weights: stored transposed (in, out), bf16
        return nrm(k, shape).astype(MATMUL_DTYPE)

    cs = channels // GN_GROUPS
    grp_idx = jnp.arange(channels) // cs
    gmat = jax.nn.one_hot(grp_idx, GN_GROUPS, dtype=jnp.float32)   # (C, G)

    return {
        "gmat": gmat,
        "gmat_t": gmat.T,
        "gn_g": 1.0 + nrm(ks[0], (1, channels), 0.1),
        "gn_b": nrm(ks[1], (1, channels), 0.1),
        "w_conv_in": wmat(ks[2], (channels, channels)),
        "b_conv_in": nrm(ks[3], (1, channels)),
        "ln1_g": 1.0 + nrm(ks[4], (1, channels), 0.1),
        "ln1_b": nrm(ks[5], (1, channels), 0.1),
        "ln2_g": 1.0 + nrm(ks[6], (1, channels), 0.1),
        "ln2_b": nrm(ks[7], (1, channels), 0.1),
        "ln3_g": 1.0 + nrm(ks[8], (1, channels), 0.1),
        "ln3_b": nrm(ks[9], (1, channels), 0.1),
        # linear_geglu_1 split into value / gate halves: (C, 4C) each.
        "w_geglu_a": wmat(ks[10], (channels, 4 * channels)),
        "b_geglu_a": nrm(ks[11], (1, 4 * channels)),
        "w_geglu_gate": wmat(ks[12], (channels, 4 * channels)),
        "b_geglu_gate": nrm(ks[13], (1, 4 * channels)),
        "w_geglu2": wmat(ks[14], (4 * channels, channels)),
        "b_geglu2": nrm(ks[15], (1, channels)),
        "w_conv_out": wmat(ks[16], (channels, channels)),
        "b_conv_out": nrm(ks[17], (1, channels)),
    }


def reference_forward(x_nchw, params):
    """Pure-JAX reference mirroring the PyTorch forward (NCHW) with the same
    matmul numerics as the kernel (bf16 operands, f32 accumulation)."""
    p = params
    n, c, h, w = x_nchw.shape
    hw = h * w
    cg = c // GN_GROUPS
    x32 = x_nchw.astype(jnp.float32)

    # GroupNorm (folded affine, same algebra as the kernel).
    xg = x32.reshape(n, GN_GROUPS, cg * hw)
    mean_g = xg.mean(-1)
    var_g = xg.var(-1)
    inv_g = jax.lax.rsqrt(var_g + GN_EPS)
    mean_c = jnp.repeat(mean_g, cg, axis=1)          # (n, c)
    inv_c = jnp.repeat(inv_g, cg, axis=1)
    scale = p["gn_g"][0] * inv_c
    bias = p["gn_b"][0] - mean_c * scale

    t = jnp.transpose(x32.reshape(n, c, hw), (0, 2, 1))    # (n, hw, c)
    residue_long = t
    t = t * scale[:, None, :] + bias[:, None, :]

    def mm(a, wt):
        return jnp.dot(a.astype(MATMUL_DTYPE), wt, preferred_element_type=jnp.float32)

    def ln(v, g, b):
        mu = v.mean(-1, keepdims=True)
        var = (v * v).mean(-1, keepdims=True) - mu * mu
        return (v - mu) * jax.lax.rsqrt(var + LN_EPS) * g + b

    t = mm(t, p["w_conv_in"]) + p["b_conv_in"]
    t = ln(t, p["ln1_g"], p["ln1_b"]) + t                  # attention_1 output discarded
    t = ln(t, p["ln2_g"], p["ln2_b"]) + t                  # attention_2 output discarded
    res = t
    t3 = ln(t, p["ln3_g"], p["ln3_b"])
    a = mm(t3, p["w_geglu_a"]) + p["b_geglu_a"]
    gate = mm(t3, p["w_geglu_gate"]) + p["b_geglu_gate"]
    t = a * (0.5 * gate * (1.0 + jax.lax.erf(gate * _INV_SQRT2)))
    t = mm(t, p["w_geglu2"]) + p["b_geglu2"]
    t = t + res
    out_tok = mm(t, p["w_conv_out"]) + p["b_conv_out"] + residue_long
    return jnp.transpose(out_tok, (0, 2, 1)).reshape(n, c, h, w)


if __name__ == "__main__":
    key = jax.random.PRNGKey(0)
    n_heads, n_embed = 4, 32                  # channels = 128 (GroupNorm needs C % 32 == 0)
    channels = n_heads * n_embed
    batch, h, w = 2, 16, 16                   # HW = 256
    seq, d_context = 8, 64                    # context is unused by the reference forward

    k_x, k_ctx, k_p = jax.random.split(key, 3)
    x = jax.random.normal(k_x, (batch, channels, h, w), jnp.float32)
    context = jax.random.normal(k_ctx, (batch, seq, d_context), jnp.float32)
    params = init_params(k_p, n_heads, n_embed)

    # tile_hw=128 -> grid (2, 2); geglu_chunk=256 -> 2 hidden chunks (exercises
    # both the HW tiling and the chunked-GeGLU path at this small shape).
    out = unet_attention_block(x, context, params, tile_hw=128, geglu_chunk=256)
    out = jax.block_until_ready(out)

    ref = reference_forward(x, params)
    assert out.shape == x.shape and out.dtype == jnp.float32
    max_err = float(jnp.max(jnp.abs(out - ref)))
    # bf16 MXU operands in both kernel and reference; remaining mismatch comes
    # only from GroupNorm-stat accumulation order amplified by bf16 rounding.
    assert jnp.allclose(out, ref, rtol=1e-2, atol=1e-2), f"max_err={max_err}"

    print("KERNEL_OK")
</pallas_src>

<mosaic_0001>
module attributes {stable_mosaic.version = 11 : i64} {
  func.func @gn_stats_kernel(%arg0: i32, %arg1: i32, %arg2: memref<1x256x128xf32, #tpu.memory_space<vmem>>, %arg3: memref<128x32xf32, #tpu.memory_space<vmem>>, %arg4: memref<32x128xf32, #tpu.memory_space<vmem>>, %arg5: memref<1x128xf32, #tpu.memory_space<vmem>>, %arg6: memref<1x128xf32, #tpu.memory_space<vmem>>, %arg7: memref<1x1x128xf32, #tpu.memory_space<vmem>>, %arg8: memref<1x1x128xf32, #tpu.memory_space<vmem>>, %arg9: memref<1x128xf32, #tpu.memory_space<vmem>>, %arg10: memref<1x128xf32, #tpu.memory_space<vmem>>) attributes {dimension_semantics = [#tpu.dimension_semantics<parallel>, #tpu.dimension_semantics<arbitrary>], iteration_bounds = array<i64: 2, 1>, scalar_prefetch = 0 : i64, scratch_operands = 2 : i64, tpu.core_type = #tpu.core_type<tc>, window_params = [{transform_indices = @transform_0, window_bounds = array<i64: 1, 256, 128>}, {pipeline_mode = #tpu.pipeline_mode<synchronous>, transform_indices = @transform_1, window_bounds = array<i64: 128, 32>}, {pipeline_mode = #tpu.pipeline_mode<synchronous>, transform_indices = @transform_2, window_bounds = array<i64: 32, 128>}, {pipeline_mode = #tpu.pipeline_mode<synchronous>, transform_indices = @transform_3, window_bounds = array<i64: 1, 128>}, {pipeline_mode = #tpu.pipeline_mode<synchronous>, transform_indices = @transform_4, window_bounds = array<i64: 1, 128>}, {transform_indices = @transform_5, window_bounds = array<i64: 1, 1, 128>}, {transform_indices = @transform_6, window_bounds = array<i64: 1, 1, 128>}]} {
    %c0_i32 = arith.constant 0 : i32
    %0 = arith.cmpi eq, %arg1, %c0_i32 : i32
    %1 = arith.extui %0 : i1 to i32
    %c0_i32_0 = arith.constant 0 : i32
    %2 = arith.cmpi ne, %1, %c0_i32_0 : i32
    scf.if %2 {
      %cst_14 = arith.constant 0.000000e+00 : f32
      %19 = vector.broadcast %cst_14 : f32 to vector<1x128xf32>
      %c0_15 = arith.constant 0 : index
      %c0_16 = arith.constant 0 : index
      %20 = vector.load %arg9[%c0_15, %c0_16] : memref<1x128xf32, #tpu.memory_space<vmem>>, vector<1x128xf32>
      tpu.vector_store %arg9[%c0_15, %c0_16], %19 {strides = array<i32>} : memref<1x128xf32, #tpu.memory_space<vmem>>, vector<1x128xf32>,
      %cst_17 = arith.constant 0.000000e+00 : f32
      %21 = vector.broadcast %cst_17 : f32 to vector<1x128xf32>
      %c0_18 = arith.constant 0 : index
      %c0_19 = arith.constant 0 : index
      %22 = vector.load %arg10[%c0_18, %c0_19] : memref<1x128xf32, #tpu.memory_space<vmem>>, vector<1x128xf32>
      tpu.vector_store %arg10[%c0_18, %c0_19], %21 {strides = array<i32>} : memref<1x128xf32, #tpu.memory_space<vmem>>, vector<1x128xf32>,
    } else {
    }
    %c0 = arith.constant 0 : index
    %c0_1 = arith.constant 0 : index
    %c0_2 = arith.constant 0 : index
    %3 = vector.load %arg2[%c0, %c0_1, %c0_2] : memref<1x256x128xf32, #tpu.memory_space<vmem>>, vector<1x256x128xf32>
    %4 = vector.shape_cast %3 : vector<1x256x128xf32> to vector<256x128xf32>
    %c0_3 = arith.constant 0 : index
    %c0_4 = arith.constant 0 : index
    %5 = vector.load %arg9[%c0_3, %c0_4] : memref<1x128xf32, #tpu.memory_space<vmem>>, vector<1x128xf32>
    %cst = arith.constant dense<0.000000e+00> : vector<128xf32>
    %6 = vector.multi_reduction <add>, %4, %cst [0] : vector<256x128xf32> to vector<128xf32>
    %7 = vector.shape_cast %6 : vector<128xf32> to vector<1x128xf32>
    %8 = arith.addf %5, %7 : vector<1x128xf32>
    %c0_5 = arith.constant 0 : index
    %c0_6 = arith.constant 0 : index
    %9 = vector.load %arg9[%c0_5, %c0_6] : memref<1x128xf32, #tpu.memory_space<vmem>>, vector<1x128xf32>
    tpu.vector_store %arg9[%c0_5, %c0_6], %8 {strides = array<i32>} : memref<1x128xf32, #tpu.memory_space<vmem>>, vector<1x128xf32>,
    %c0_7 = arith.constant 0 : index
    %c0_8 = arith.constant 0 : index
    %10 = vector.load %arg10[%c0_7, %c0_8] : memref<1x128xf32, #tpu.memory_space<vmem>>, vector<1x128xf32>
    %11 = arith.mulf %4, %4 : vector<256x128xf32>
    %cst_9 = arith.constant dense<0.000000e+00> : vector<128xf32>
    %12 = vector.multi_reduction <add>, %11, %cst_9 [0] : vector<256x128xf32> to vector<128xf32>
    %13 = vector.shape_cast %12 : vector<128xf32> to vector<1x128xf32>
    %14 = arith.addf %10, %13 : vector<1x128xf32>
    %c0_10 = arith.constant 0 : index
    %c0_11 = arith.constant 0 : index
    %15 = vector.load %arg10[%c0_10, %c0_11] : memref<1x128xf32, #tpu.memory_space<vmem>>, vector<1x128xf32>
    tpu.vector_store %arg10[%c0_10, %c0_11], %14 {strides = array<i32>} : memref<1x128xf32, #tpu.memory_space<vmem>>, vector<1x128xf32>,
    %c0_i32_12 = arith.constant 0 : i32
    %16 = arith.cmpi eq, %arg1, %c0_i32_12 : i32
    %17 = arith.extui %16 : i1 to i32
    %c0_i32_13 = arith.constant 0 : i32
    %18 = arith.cmpi ne, %17, %c0_i32_13 : i32
    scf.if %18 {
      %c0_14 = arith.constant 0 : index
      %c0_15 = arith.constant 0 : index
      %19 = vector.load %arg3[%c0_14, %c0_15] : memref<128x32xf32, #tpu.memory_space<vmem>>, vector<128x32xf32>
      %c0_16 = arith.constant 0 : index
      %c0_17 = arith.constant 0 : index
      %20 = vector.load %arg4[%c0_16, %c0_17] : memref<32x128xf32, #tpu.memory_space<vmem>>, vector<32x128xf32>
      %c0_18 = arith.constant 0 : index
      %c0_19 = arith.constant 0 : index
      %21 = vector.load %arg9[%c0_18, %c0_19] : memref<1x128xf32, #tpu.memory_space<vmem>>, vector<1x128xf32>
      %cst_20 = arith.constant dense<0.000000e+00> : vector<1x32xf32>
      %22 = tpu.matmul %21, %19, %cst_20 {dimension_numbers = #tpu.dot_dimension_numbers<[1], [0], [0], [1], [0, 0, 1, 1], [], []>} : vector<1x128xf32>, vector<128x32xf32>, vector<1x32xf32> -> vector<1x32xf32>
      %c0_21 = arith.constant 0 : index
      %c0_22 = arith.constant 0 : index
      %23 = vector.load %arg10[%c0_21, %c0_22] : memref<1x128xf32, #tpu.memory_space<vmem>>, vector<1x128xf32>
      %cst_23 = arith.constant dense<0.000000e+00> : vector<1x32xf32>
      %24 = tpu.matmul %23, %19, %cst_23 {dimension_numbers = #tpu.dot_dimension_numbers<[1], [0], [0], [1], [0, 0, 1, 1], [], []>} : vector<1x128xf32>, vector<128x32xf32>, vector<1x32xf32> -> vector<1x32xf32>
      %cst_24 = arith.constant 1.024000e+03 : f32
      %25 = vector.broadcast %cst_24 : f32 to vector<1x32xf32>
      %26 = arith.divf %22, %25 : vector<1x32xf32>
      %cst_25 = arith.constant 1.024000e+03 : f32
      %27 = vector.broadcast %cst_25 : f32 to vector<1x32xf32>
      %28 = arith.divf %24, %27 : vector<1x32xf32>
      %29 = arith.mulf %26, %26 : vector<1x32xf32>
      %30 = arith.subf %28, %29 : vector<1x32xf32>
      %cst_26 = arith.constant 9.99999997E-7 : f32
      %31 = vector.broadcast %cst_26 : f32 to vector<1x32xf32>
      %32 = arith.addf %30, %31 : vector<1x32xf32>
      %33 = math.rsqrt %32 : vector<1x32xf32>
      %cst_27 = arith.constant dense<0.000000e+00> : vector<1x128xf32>
      %34 = tpu.matmul %26, %20, %cst_27 {dimension_numbers = #tpu.dot_dimension_numbers<[1], [0], [0], [1], [0, 0, 1, 1], [], []>} : vector<1x32xf32>, vector<32x128xf32>, vector<1x128xf32> -> vector<1x128xf32>
      %cst_28 = arith.constant dense<0.000000e+00> : vector<1x128xf32>
      %35 = tpu.matmul %33, %20, %cst_28 {dimension_numbers = #tpu.dot_dimension_numbers<[1], [0], [0], [1], [0, 0, 1, 1], [], []>} : vector<1x32xf32>, vector<32x128xf32>, vector<1x128xf32> -> vector<1x128xf32>
      %c0_29 = arith.constant 0 : index
      %c0_30 = arith.constant 0 : index
      %36 = vector.load %arg5[%c0_29, %c0_30] : memref<1x128xf32, #tpu.memory_space<vmem>>, vector<1x128xf32>
      %37 = arith.mulf %36, %35 : vector<1x128xf32>
      %c0_31 = arith.constant 0 : index
      %c0_32 = arith.constant 0 : index
      %38 = vector.load %arg6[%c0_31, %c0_32] : memref<1x128xf32, #tpu.memory_space<vmem>>, vector<1x128xf32>
      %39 = arith.mulf %34, %37 : vector<1x128xf32>
      %40 = arith.subf %38, %39 : vector<1x128xf32>
      %c0_33 = arith.constant 0 : index
      %c0_34 = arith.constant 0 : index
      %c0_35 = arith.constant 0 : index
      %41 = vector.load %arg7[%c0_33, %c0_34, %c0_35] : memref<1x1x128xf32, #tpu.memory_space<vmem>>, vector<1x1x128xf32>
      %42 = vector.shape_cast %41 : vector<1x1x128xf32> to vector<1x128xf32>
      %43 = vector.shape_cast %37 : vector<1x128xf32> to vector<1x1x128xf32>
      tpu.vector_store %arg7[%c0_33, %c0_34, %c0_35], %43 {strides = array<i32>} : memref<1x1x128xf32, #tpu.memory_space<vmem>>, vector<1x1x128xf32>,
      %c0_36 = arith.constant 0 : index
      %c0_37 = arith.constant 0 : index
      %c0_38 = arith.constant 0 : index
      %44 = vector.load %arg8[%c0_36, %c0_37, %c0_38] : memref<1x1x128xf32, #tpu.memory_space<vmem>>, vector<1x1x128xf32>
      %45 = vector.shape_cast %44 : vector<1x1x128xf32> to vector<1x128xf32>
      %46 = vector.shape_cast %40 : vector<1x128xf32> to vector<1x1x128xf32>
      tpu.vector_store %arg8[%c0_36, %c0_37, %c0_38], %46 {strides = array<i32>} : memref<1x1x128xf32, #tpu.memory_space<vmem>>, vector<1x1x128xf32>,
    } else {
    }
    return
  }
  func.func @transform_0(%arg0: i32, %arg1: i32) -> (i32, i32, i32) {
    %c0_i32 = arith.constant 0 : i32
    %c0_i32_0 = arith.constant 0 : i32
    return %arg0, %arg1, %c0_i32 : i32, i32, i32
  }
  func.func @transform_1(%arg0: i32, %arg1: i32) -> (i32, i32) {
    %c0_i32 = arith.constant 0 : i32
    %c0_i32_0 = arith.constant 0 : i32
    %c0_i32_1 = arith.constant 0 : i32
    return %c0_i32, %c0_i32_0 : i32, i32
  }
  func.func @transform_2(%arg0: i32, %arg1: i32) -> (i32, i32) {
    %c0_i32 = arith.constant 0 : i32
    %c0_i32_0 = arith.constant 0 : i32
    %c0_i32_1 = arith.constant 0 : i32
    return %c0_i32, %c0_i32_0 : i32, i32
  }
  func.func @transform_3(%arg0: i32, %arg1: i32) -> (i32, i32) {
    %c0_i32 = arith.constant 0 : i32
    %c0_i32_0 = arith.constant 0 : i32
    %c0_i32_1 = arith.constant 0 : i32
    return %c0_i32, %c0_i32_0 : i32, i32
  }
  func.func @transform_4(%arg0: i32, %arg1: i32) -> (i32, i32) {
    %c0_i32 = arith.constant 0 : i32
    %c0_i32_0 = arith.constant 0 : i32
    %c0_i32_1 = arith.constant 0 : i32
    return %c0_i32, %c0_i32_0 : i32, i32
  }
  func.func @transform_5(%arg0: i32, %arg1: i32) -> (i32, i32, i32) {
    %c0_i32 = arith.constant 0 : i32
    %c0_i32_0 = arith.constant 0 : i32
    %c0_i32_1 = arith.constant 0 : i32
    return %arg0, %c0_i32, %c0_i32_0 : i32, i32, i32
  }
  func.func @transform_6(%arg0: i32, %arg1: i32) -> (i32, i32, i32) {
    %c0_i32 = arith.constant 0 : i32
    %c0_i32_0 = arith.constant 0 : i32
    %c0_i32_1 = arith.constant 0 : i32
    return %arg0, %c0_i32, %c0_i32_0 : i32, i32, i32
  }
}

</mosaic_0001>

<llo_original>
// kernel: tpu_custom_call.1
$region0: #{tpu_custom_call.1}
  #allocation0 [shape = 'u32[]', space=smem, size = 0x4, offset = 0x4, fixed_abs, tag = 'smem constant byte address 0x4 - core index']
  #allocation1 [shape = 'u32[144,128]{1,0:T(1,128)}', space=vmem, size = 0x12000, scoped, tag = 'internal scratch']
  #allocation2 [shape = 'f32[1,128]{1,0:T(1,128)}', space=vmem, size = 0x200, scoped, tag = 'scratch operand']
  #allocation3 [shape = 'f32[1,128]{1,0:T(1,128)}', space=vmem, size = 0x200, scoped, tag = 'scratch operand']
  %s0 = inlined_call_operand.hbm [shape: f32[2,256,128], index: 0, kind: input, shape index: {}]
  %s1 = inlined_call_operand.vmem [shape: f32[128,32], index: 1, kind: input, shape index: {}]
  %s2 = inlined_call_operand.vmem [shape: f32[32,128], index: 2, kind: input, shape index: {}]
  %s3 = inlined_call_operand.vmem [shape: f32[1,128], index: 3, kind: input, shape index: {}]
  %s4 = inlined_call_operand.vmem [shape: f32[1,128], index: 4, kind: input, shape index: {}]
  %s5 = inlined_call_operand.hbm [shape: f32[2,1,128], index: 5, kind: output, shape index: {0}]
  %s6 = inlined_call_operand.hbm [shape: f32[2,1,128], index: 6, kind: output, shape index: {1}]
  %7 = xla_tuple %s5, %s6
  %s8 = sld [smem:[#allocation0]]
  $region73: #{tpu_custom_call.1} parent=0
    _
  %s10 = ssub.s32 1, %s8
  %s11 = scalar_select 0, %s10, %s8
  $region1: #{tpu_custom_call.1} parent=0
    #allocation4 [shape = 'u8[262144]{0}', space=vmem, size = 0x40000, scoped, tag = 'input window, operand 0']
    #allocation5 [shape = 's32[2]{0}', space=sflag, size = 0x8, scoped, tag = 'scoped memory for tpu_custom_call.1']
    #allocation6 [shape = 's32[2]{0}', space=sflag, size = 0x8, scoped, tag = 'scoped memory for tpu_custom_call.1']
    #allocation7 [shape = 'u8[1024]{0}', space=vmem, size = 0x400, scoped, tag = 'output window, operand 0']
    #allocation8 [shape = 'u8[1024]{0}', space=vmem, size = 0x400, scoped, tag = 'output window, operand 1']
    #allocation9 [shape = 's32[2]{0}', space=sflag, size = 0x8, scoped, tag = 'scoped memory for tpu_custom_call.1']
    %12 = vsyncpa [#allocation5], 0
    %s13 = scalar_lea.sflag [#allocation5], 1
    %14 = vsyncpa %s13, 0
    %15 = vsyncpa [#allocation6], 0
    %s16 = scalar_lea.sflag [#allocation6], 1
    %17 = vsyncpa %s16, 0
    %18 = vsyncpa [#allocation9], 0
    %s19 = scalar_lea.sflag [#allocation9], 1
    %20 = vsyncpa %s19, 0
    loop: start=0, step=1, limit=4
    $region2: #{tpu_custom_call.1} parent=1 // loop_pre_header
      _
    $region3: #{tpu_custom_call.1} parent=1 // loop_header
      %s22 = sphi 0, %s26
      %p23 = scmp.ge.s32.totalorder %s22, 4
      %s29 = sphi 0, %s41
      %s30 = sphi 0, %s37
      %s31 = sphi 0, %s29
      %s32 = sphi 0, %s30
      %s33 = sphi 0, %s31
      %s34 = sphi 0, %s32
      %s46 = sphi 0, %s48
      %s49 = sphi 0, %s46
      %s50 = sphi 0, %s49
      %s66 = sphi 0, %s50
      %s70 = sphi 0, %s70
      %s72 = sphi 0, %s70
      %s73 = sphi 0, %s72
      %s87 = sphi 0, %s73
      %s91 = sphi 0, %s91
      %s93 = sphi 0, %s91
      %s94 = sphi 0, %s93
      %s108 = sphi 0, %s94
      %s112 = sphi 0, %s112
      %s114 = sphi 0, %s112
      %s115 = sphi 0, %s114
      %s129 = sphi 0, %s115
      %s133 = sphi 0, %s133
      %s135 = sphi 0, %s133
      %s136 = sphi 0, %s135
      %s150 = sphi 0, %s136
      %s156 = sphi 0, %s158
      %s159 = sphi 0, %s156
      %s160 = sphi 0, %s159
      %s176 = sphi 0, %s160
      %s182 = sphi 0, %s184
      %s185 = sphi 0, %s182
      %s186 = sphi 0, %s185
      %s202 = sphi 0, %s186
    $region4: #{tpu_custom_call.1} parent=1 // loop_header_branch
      %25 = sbr.rel (%p23) target = $region8
    $region5: #{tpu_custom_call.1} parent=1 // loop_body
      %s27 = ssub.s32 %s22, 1
      %s28 = ssub.s32 %s22, 2
      %s35 = sadd.s32 1, %s30
      %p36 = scmp.ge.s32.totalorder %s35, 1
      %s37 = scalar_select %p36, 0, %s35
      %s38 = sadd.s32 1, %s29
      %s39 = scalar_select %p36, %s38, %s29
      %p40 = scmp.ge.s32.totalorder %s39, 2
      %s41 = scalar_select %p40, 0, %s39
      %s42 = ssub.s32 %s29, %s41
      %s43 = ssub.s32 %s30, %s37
      %s44 = sor.u32 %s42, %s43
      %p45 = scmp.eq.s32.totalorder %s44, 0
      %s47 = sadd.s32 %s46, 1
      %s48 = scalar_select %p45, %s46, %s47
      %p51 = pneg %p45
      %p52 = scmp.eq.s32.totalorder %s22, 1
      %p53 = por %p51, %p52
      %p54 = scmp.ne.s32.totalorder %s46, %s49
      %p55 = scmp.eq.s32.totalorder %s22, 0
      %p56 = por %p54, %p55
      %p57 = scmp.ne.s32.totalorder %s46, %s49
      %p58 = scmp.eq.s32.totalorder %s27, 1
      %p59 = por %p57, %p58
      %p60 = scmp.ne.s32.totalorder %s49, %s50
      %p61 = scmp.eq.s32.totalorder %s27, 0
      %p62 = por %p60, %p61
      %p63 = scmp.ne.s32.totalorder %s49, %s50
      %p64 = scmp.eq.s32.totalorder %s28, 1
      %p65 = por %p63, %p64
      %p67 = scmp.ne.s32.totalorder %s50, %s66
      %p68 = scmp.eq.s32.totalorder %s28, 0
      %p69 = por %p67, %p68
      %s71 = sadd.s32 %s70, 1
      %p74 = scmp.eq.s32.totalorder %s22, 1
      %p75 = scmp.ne.s32.totalorder %s70, %s72
      %p76 = scmp.eq.s32.totalorder %s22, 0
      %p77 = por %p75, %p76
      %p78 = scmp.ne.s32.totalorder %s70, %s72
      %p79 = scmp.eq.s32.totalorder %s27, 1
      %p80 = por %p78, %p79
      %p81 = scmp.ne.s32.totalorder %s72, %s73
      %p82 = scmp.eq.s32.totalorder %s27, 0
      %p83 = por %p81, %p82
      %p84 = scmp.ne.s32.totalorder %s72, %s73
      %p85 = scmp.eq.s32.totalorder %s28, 1
      %p86 = por %p84, %p85
      %p88 = scmp.ne.s32.totalorder %s73, %s87
      %p89 = scmp.eq.s32.totalorder %s28, 0
      %p90 = por %p88, %p89
      %s92 = sadd.s32 %s91, 1
      %p95 = scmp.eq.s32.totalorder %s22, 1
      %p96 = scmp.ne.s32.totalorder %s91, %s93
      %p97 = scmp.eq.s32.totalorder %s22, 0
      %p98 = por %p96, %p97
      %p99 = scmp.ne.s32.totalorder %s91, %s93
      %p100 = scmp.eq.s32.totalorder %s27, 1
      %p101 = por %p99, %p100
      %p102 = scmp.ne.s32.totalorder %s93, %s94
      %p103 = scmp.eq.s32.totalorder %s27, 0
      %p104 = por %p102, %p103
      %p105 = scmp.ne.s32.totalorder %s93, %s94
      %p106 = scmp.eq.s32.totalorder %s28, 1
      %p107 = por %p105, %p106
      %p109 = scmp.ne.s32.totalorder %s94, %s108
      %p110 = scmp.eq.s32.totalorder %s28, 0
      %p111 = por %p109, %p110
      %s113 = sadd.s32 %s112, 1
      %p116 = scmp.eq.s32.totalorder %s22, 1
      %p117 = scmp.ne.s32.totalorder %s112, %s114
      %p118 = scmp.eq.s32.totalorder %s22, 0
      %p119 = por %p117, %p118
      %p120 = scmp.ne.s32.totalorder %s112, %s114
      %p121 = scmp.eq.s32.totalorder %s27, 1
      %p122 = por %p120, %p121
      %p123 = scmp.ne.s32.totalorder %s114, %s115
      %p124 = scmp.eq.s32.totalorder %s27, 0
      %p125 = por %p123, %p124
      %p126 = scmp.ne.s32.totalorder %s114, %s115
      %p127 = scmp.eq.s32.totalorder %s28, 1
      %p128 = por %p126, %p127
      %p130 = scmp.ne.s32.totalorder %s115, %s129
      %p131 = scmp.eq.s32.totalorder %s28, 0
      %p132 = por %p130, %p131
      %s134 = sadd.s32 %s133, 1
      %p137 = scmp.eq.s32.totalorder %s22, 1
      %p138 = scmp.ne.s32.totalorder %s133, %s135
      %p139 = scmp.eq.s32.totalorder %s22, 0
      %p140 = por %p138, %p139
      %p141 = scmp.ne.s32.totalorder %s133, %s135
      %p142 = scmp.eq.s32.totalorder %s27, 1
      %p143 = por %p141, %p142
      %p144 = scmp.ne.s32.totalorder %s135, %s136
      %p145 = scmp.eq.s32.totalorder %s27, 0
      %p146 = por %p144, %p145
      %p147 = scmp.ne.s32.totalorder %s135, %s136
      %p148 = scmp.eq.s32.totalorder %s28, 1
      %p149 = por %p147, %p148
      %p151 = scmp.ne.s32.totalorder %s136, %s150
      %p152 = scmp.eq.s32.totalorder %s28, 0
      %p153 = por %p151, %p152
      %s154 = ssub.s32 %s29, %s41
      %p155 = scmp.eq.s32.totalorder %s154, 0
      %s157 = sadd.s32 %s156, 1
      %s158 = scalar_select %p155, %s156, %s157
      %p161 = pneg %p155
      %p162 = scmp.eq.s32.totalorder %s22, 1
      %p163 = por %p161, %p162
      %p164 = scmp.ne.s32.totalorder %s156, %s159
      %p165 = scmp.eq.s32.totalorder %s22, 0
      %p166 = por %p164, %p165
      %p167 = scmp.ne.s32.totalorder %s156, %s159
      %p168 = scmp.eq.s32.totalorder %s27, 1
      %p169 = por %p167, %p168
      %p170 = scmp.ne.s32.totalorder %s159, %s160
      %p171 = scmp.eq.s32.totalorder %s27, 0
      %p172 = por %p170, %p171
      %p173 = scmp.ne.s32.totalorder %s159, %s160
      %p174 = scmp.eq.s32.totalorder %s28, 1
      %p175 = por %p173, %p174
      %p177 = scmp.ne.s32.totalorder %s160, %s176
      %p178 = scmp.eq.s32.totalorder %s28, 0
      %p179 = por %p177, %p178
      %s180 = ssub.s32 %s29, %s41
      %p181 = scmp.eq.s32.totalorder %s180, 0
      %s183 = sadd.s32 %s182, 1
      %s184 = scalar_select %p181, %s182, %s183
      %p187 = pneg %p181
      %p188 = scmp.eq.s32.totalorder %s22, 1
      %p189 = por %p187, %p188
      %p190 = scmp.ne.s32.totalorder %s182, %s185
      %p191 = scmp.eq.s32.totalorder %s22, 0
      %p192 = por %p190, %p191
      %p193 = scmp.ne.s32.totalorder %s182, %s185
      %p194 = scmp.eq.s32.totalorder %s27, 1
      %p195 = por %p193, %p194
      %p196 = scmp.ne.s32.totalorder %s185, %s186
      %p197 = scmp.eq.s32.totalorder %s27, 0
      %p198 = por %p196, %p197
      %p199 = scmp.ne.s32.totalorder %s185, %s186
      %p200 = scmp.eq.s32.totalorder %s28, 1
      %p201 = por %p199, %p200
      %p203 = scmp.ne.s32.totalorder %s186, %s202
      %p204 = scmp.eq.s32.totalorder %s28, 0
      %p205 = por %p203, %p204
      %p206 = scmp.le.s32.totalorder 1, %s22
      %p207 = scmp.lt.s32.totalorder %s22, 3
      %p208 = pnand %p206, %p207
      %p209 = pneg %p208
      // Predicated region
      $region9: #{tpu_custom_call.1} parent=5 // pred_check
        _
      $region10: #{tpu_custom_call.1} parent=5 // pred_check_branch
        %211 = sbr.rel (%p208) target = $region12
      $region11: #{tpu_custom_call.1} parent=5 // pred_region
        %s212 = ssub.s32 %s22, 1
        // Predicated region
        $region13: #{tpu_custom_call.1} parent=11 // pred_check
          %p213 = pneg %p83
        $region14: #{tpu_custom_call.1} parent=11 // pred_check_branch
          %215 = sbr.rel (%p213) target = $region16
        $region15: #{tpu_custom_call.1} parent=11 // pred_region
          _
        $region16: #{tpu_custom_call.1} parent=11 // pred_fallthru
          _
        // Predicated region
        $region17: #{tpu_custom_call.1} parent=11 // pred_check
          %p216 = pneg %p104
        $region18: #{tpu_custom_call.1} parent=11 // pred_check_branch
          %218 = sbr.rel (%p216) target = $region20
        $region19: #{tpu_custom_call.1} parent=11 // pred_region
          _
        $region20: #{tpu_custom_call.1} parent=11 // pred_fallthru
          _
        // Predicated region
        $region21: #{tpu_custom_call.1} parent=11 // pred_check
          %p219 = pneg %p125
        $region22: #{tpu_custom_call.1} parent=11 // pred_check_branch
          %221 = sbr.rel (%p219) target = $region24
        $region23: #{tpu_custom_call.1} parent=11 // pred_region
          _
        $region24: #{tpu_custom_call.1} parent=11 // pred_fallthru
          _
        // Predicated region
        $region25: #{tpu_custom_call.1} parent=11 // pred_check
          %p222 = pneg %p146
        $region26: #{tpu_custom_call.1} parent=11 // pred_check_branch
          %224 = sbr.rel (%p222) target = $region28
        $region27: #{tpu_custom_call.1} parent=11 // pred_region
          _
        $region28: #{tpu_custom_call.1} parent=11 // pred_fallthru
          _
      $region12: #{tpu_custom_call.1} parent=5 // pred_fallthru
        _
      %p225 = scmp.lt.s32.totalorder %s22, 2
      // Predicated region
      $region29: #{tpu_custom_call.1} parent=5 // pred_check
        %p226 = pneg %p225
      $region30: #{tpu_custom_call.1} parent=5 // pred_check_branch
        %228 = sbr.rel (%p226) target = $region32
      $region31: #{tpu_custom_call.1} parent=5 // pred_region
        // Predicated region
        $region33: #{tpu_custom_call.1} parent=31 // pred_check
          %p229 = pneg %p56
        $region34: #{tpu_custom_call.1} parent=31 // pred_check_branch
          %231 = sbr.rel (%p229) target = $region36
        $region35: #{tpu_custom_call.1} parent=31 // pred_region
          %s232 = sand.u32 %s46, 1
          %s233 = scalar_lea.sflag [#allocation5], %s232
          %s234 = sand.u32 %s46, 1
          %s235 = smul.addr %s234, 256
          %s236 = scalar_lea.vmem [#allocation4], %s235
          %s237 = smul.u32 32, %s30
          %s239 = ssub.s32 4096, 4096
          %240 = vsyncadd %s233, %s239
          %s241 = smul.addr %s29, 32
          %s242 = sadd.s32 %s237, %s241
          %s243 = smul.addr %s242, 128
          %s244 = scalar_lea.hbm %s0, %s243
          %s245 = sshll.u32 %s236, 4
          %s246 = int_to_ptr.vmem [resolvable:$true] %s245
          %251 = dma.hbm_to_vmem [thread:$0]  %s244, 4096, %s246, %s233, 128, 128, 8
        $region36: #{tpu_custom_call.1} parent=31 // pred_fallthru
          _
      $region32: #{tpu_custom_call.1} parent=5 // pred_fallthru
        _
      %p252 = scmp.le.s32.totalorder 1, %s22
      %p253 = scmp.lt.s32.totalorder %s22, 3
      %p254 = pnand %p252, %p253
      %p255 = pneg %p254
      // Predicated region
      $region37: #{tpu_custom_call.1} parent=5 // pred_check
        _
      $region38: #{tpu_custom_call.1} parent=5 // pred_check_branch
        %257 = sbr.rel (%p254) target = $region40
      $region39: #{tpu_custom_call.1} parent=5 // pred_region
        %s258 = ssub.s32 %s22, 1
        %s259 = sand.u32 %s49, 1
        %s260 = scalar_lea.sflag [#allocation5], %s259
        %s261 = sand.u32 %s49, 1
        %s262 = smul.addr %s261, 256
        %s263 = scalar_lea.vmem [#allocation4], %s262
        // Predicated region
        $region41: #{tpu_custom_call.1} parent=39 // pred_check
          %p264 = pneg %p62
        $region42: #{tpu_custom_call.1} parent=39 // pred_check_branch
          %266 = sbr.rel (%p264) target = $region44
        $region43: #{tpu_custom_call.1} parent=39 // pred_region
          %267 = dma.done %s260, 4096
        $region44: #{tpu_custom_call.1} parent=39 // pred_fallthru
          _
        %s268 = sand.u32 %s49, 1
        %s269 = scalar_lea.sflag [#allocation5], %s268
        %s270 = sand.u32 %s49, 1
        %s271 = smul.addr %s270, 256
        %s272 = scalar_lea.vmem [#allocation4], %s271
        %p273 = pneg %p62
        %p274 = pneg %p59
        %p275 = pneg %p83
        %p276 = pneg %p80
        %p277 = pneg %p104
        %p278 = pneg %p101
        %p279 = pneg %p125
        %p280 = pneg %p122
        %p281 = pneg %p146
        %p282 = pneg %p143
        %p283 = pneg %p172
        %p284 = pneg %p169
        %s285 = sand.u32 %s159, 1
        %s286 = scalar_lea.sflag [#allocation6], %s285
        %s287 = sand.u32 %s159, 1
        %s288 = scalar_lea.vmem [#allocation7], %s287
        %p289 = pneg %p198
        %p290 = pneg %p195
        %s291 = sand.u32 %s185, 1
        %s292 = scalar_lea.sflag [#allocation9], %s291
        %s293 = sand.u32 %s185, 1
        %s294 = scalar_lea.vmem [#allocation8], %s293
        %s295 = smul.u32 32, %s32
        %p296 = scmp.eq.s32.totalorder %s32, 0
        // Predicated region
        $region45: #{tpu_custom_call.1} parent=39 // pred_check
          %p297 = pneg %p296
        $region46: #{tpu_custom_call.1} parent=39 // pred_check_branch
          %299 = sbr.rel (%p297) target = $region48
        $region47: #{tpu_custom_call.1} parent=39 // pred_region
          %300 = vst [vmem:[#allocation2] sm:$0x1] 0.0
          %301 = vst [vmem:[#allocation3] sm:$0x1] 0.0
        $region48: #{tpu_custom_call.1} parent=39 // pred_fallthru
          _
        %v302 = vld [vmem:[%s263] sm:$0xff]
        %v303 = vld [vmem:[%s263 + $0x8] sm:$0xff]
        %v304 = vld [vmem:[%s263 + $0x10] sm:$0xff]
        %v305 = vld [vmem:[%s263 + $0x18] sm:$0xff]
        %v306 = vld [vmem:[%s263 + $0x20] sm:$0xff]
        %v307 = vld [vmem:[%s263 + $0x28] sm:$0xff]
        %v308 = vld [vmem:[%s263 + $0x30] sm:$0xff]
        %v309 = vld [vmem:[%s263 + $0x38] sm:$0xff]
        %v310 = vld [vmem:[%s263 + $0x40] sm:$0xff]
        %v311 = vld [vmem:[%s263 + $0x48] sm:$0xff]
        %v312 = vld [vmem:[%s263 + $0x50] sm:$0xff]
        %v313 = vld [vmem:[%s263 + $0x58] sm:$0xff]
        %v314 = vld [vmem:[%s263 + $0x60] sm:$0xff]
        %v315 = vld [vmem:[%s263 + $0x68] sm:$0xff]
        %v316 = vld [vmem:[%s263 + $0x70] sm:$0xff]
        %v317 = vld [vmem:[%s263 + $0x78] sm:$0xff]
        %v318 = vld [vmem:[%s263 + $0x80] sm:$0xff]
        %v319 = vld [vmem:[%s263 + $0x88] sm:$0xff]
        %v320 = vld [vmem:[%s263 + $0x90] sm:$0xff]
        %v321 = vld [vmem:[%s263 + $0x98] sm:$0xff]
        %v322 = vld [vmem:[%s263 + $0xa0] sm:$0xff]
        %v323 = vld [vmem:[%s263 + $0xa8] sm:$0xff]
        %v324 = vld [vmem:[%s263 + $0xb0] sm:$0xff]
        %v325 = vld [vmem:[%s263 + $0xb8] sm:$0xff]
        %v326 = vld [vmem:[%s263 + $0xc0] sm:$0xff]
        %v327 = vld [vmem:[%s263 + $0xc8] sm:$0xff]
        %v328 = vld [vmem:[%s263 + $0xd0] sm:$0xff]
        %v329 = vld [vmem:[%s263 + $0xd8] sm:$0xff]
        %v330 = vld [vmem:[%s263 + $0xe0] sm:$0xff]
        %v331 = vld [vmem:[%s263 + $0xe8] sm:$0xff]
        %v332 = vld [vmem:[%s263 + $0xf0] sm:$0xff]
        %v333 = vld [vmem:[%s263 + $0xf8] sm:$0xff]
        %v334 = vld [vmem:[#allocation2] sm:$0x1]
        %v335 = vadd.f32 %v302, %v303
        %v336 = vadd.f32 %v335, %v304
        %v337 = vadd.f32 %v336, %v305
        %v338 = vadd.f32 %v337, %v306
        %v339 = vadd.f32 %v338, %v307
        %v340 = vadd.f32 %v339, %v308
        %v341 = vadd.f32 %v340, %v309
        %v342 = vadd.f32 %v341, %v310
        %v343 = vadd.f32 %v342, %v311
        %v344 = vadd.f32 %v343, %v312
        %v345 = vadd.f32 %v344, %v313
        %v346 = vadd.f32 %v345, %v314
        %v347 = vadd.f32 %v346, %v315
        %v348 = vadd.f32 %v347, %v316
        %v349 = vadd.f32 %v348, %v317
        %v350 = vadd.f32 %v349, %v318
        %v351 = vadd.f32 %v350, %v319
        %v352 = vadd.f32 %v351, %v320
        %v353 = vadd.f32 %v352, %v321
        %v354 = vadd.f32 %v353, %v322
        %v355 = vadd.f32 %v354, %v323
        %v356 = vadd.f32 %v355, %v324
        %v357 = vadd.f32 %v356, %v325
        %v358 = vadd.f32 %v357, %v326
        %v359 = vadd.f32 %v358, %v327
        %v360 = vadd.f32 %v359, %v328
        %v361 = vadd.f32 %v360, %v329
        %v362 = vadd.f32 %v361, %v330
        %v363 = vadd.f32 %v362, %v331
        %v364 = vadd.f32 %v363, %v332
        %v365 = vadd.f32 %v364, %v333
        %v366 = vrot.slane %v365, 4
        %v367 = vadd.f32 %v365, %v366
        %v368 = vrot.slane %v367, 2
        %v369 = vadd.f32 %v367, %v368
        %v370 = vrot.slane %v369, 1
        %v371 = vadd.f32 %v369, %v370
        %v372 = vadd.f32 %v334, %v371
        %373 = vst [vmem:[#allocation2] sm:$0x1] %v372
        %v374 = vld [vmem:[#allocation3] sm:$0x1]
        %v375 = vmul.f32 %v302, %v302
        %v376 = vmul.f32 %v303, %v303
        %v377 = vmul.f32 %v304, %v304
        %v378 = vmul.f32 %v305, %v305
        %v379 = vmul.f32 %v306, %v306
        %v380 = vmul.f32 %v307, %v307
        %v381 = vmul.f32 %v308, %v308
        %v382 = vmul.f32 %v309, %v309
        %v383 = vmul.f32 %v310, %v310
        %v384 = vmul.f32 %v311, %v311
        %v385 = vmul.f32 %v312, %v312
        %v386 = vmul.f32 %v313, %v313
        %v387 = vmul.f32 %v314, %v314
        %v388 = vmul.f32 %v315, %v315
        %v389 = vmul.f32 %v316, %v316
        %v390 = vmul.f32 %v317, %v317
        %v391 = vmul.f32 %v318, %v318
        %v392 = vmul.f32 %v319, %v319
        %v393 = vmul.f32 %v320, %v320
        %v394 = vmul.f32 %v321, %v321
        %v395 = vmul.f32 %v322, %v322
        %v396 = vmul.f32 %v323, %v323
        %v397 = vmul.f32 %v324, %v324
        %v398 = vmul.f32 %v325, %v325
        %v399 = vmul.f32 %v326, %v326
        %v400 = vmul.f32 %v327, %v327
        %v401 = vmul.f32 %v328, %v328
        %v402 = vmul.f32 %v329, %v329
        %v403 = vmul.f32 %v330, %v330
        %v404 = vmul.f32 %v331, %v331
        %v405 = vmul.f32 %v332, %v332
        %v406 = vmul.f32 %v333, %v333
        %v407 = vadd.f32 %v375, %v376
        %v408 = vadd.f32 %v407, %v377
        %v409 = vadd.f32 %v408, %v378
        %v410 = vadd.f32 %v409, %v379
        %v411 = vadd.f32 %v410, %v380
        %v412 = vadd.f32 %v411, %v381
        %v413 = vadd.f32 %v412, %v382
        %v414 = vadd.f32 %v413, %v383
        %v415 = vadd.f32 %v414, %v384
        %v416 = vadd.f32 %v415, %v385
        %v417 = vadd.f32 %v416, %v386
        %v418 = vadd.f32 %v417, %v387
        %v419 = vadd.f32 %v418, %v388
        %v420 = vadd.f32 %v419, %v389
        %v421 = vadd.f32 %v420, %v390
        %v422 = vadd.f32 %v421, %v391
        %v423 = vadd.f32 %v422, %v392
        %v424 = vadd.f32 %v423, %v393
        %v425 = vadd.f32 %v424, %v394
        %v426 = vadd.f32 %v425, %v395
        %v427 = vadd.f32 %v426, %v396
        %v428 = vadd.f32 %v427, %v397
        %v429 = vadd.f32 %v428, %v398
        %v430 = vadd.f32 %v429, %v399
        %v431 = vadd.f32 %v430, %v400
        %v432 = vadd.f32 %v431, %v401
        %v433 = vadd.f32 %v432, %v402
        %v434 = vadd.f32 %v433, %v403
        %v435 = vadd.f32 %v434, %v404
        %v436 = vadd.f32 %v435, %v405
        %v437 = vadd.f32 %v436, %v406
        %v438 = vrot.slane %v437, 4
        %v439 = vadd.f32 %v437, %v438
        %v440 = vrot.slane %v439, 2
        %v441 = vadd.f32 %v439, %v440
        %v442 = vrot.slane %v441, 1
        %v443 = vadd.f32 %v441, %v442
        %v444 = vadd.f32 %v374, %v443
        %445 = vst [vmem:[#allocation3] sm:$0x1] %v444
        // Predicated region
        $region49: #{tpu_custom_call.1} parent=39 // pred_check
          %p446 = pneg %p296
        $region50: #{tpu_custom_call.1} parent=39 // pred_check_branch
          %448 = sbr.rel (%p446) target = $region52
        $region51: #{tpu_custom_call.1} parent=39 // pred_region
          %v449 = vld [vmem:[%s1] sm:$0xff]
          %v450 = vld [vmem:[%s1 + $0x8] sm:$0xff]
          %v451 = vld [vmem:[%s1 + $0x10] sm:$0xff]
          %v452 = vld [vmem:[%s1 + $0x18] sm:$0xff]
          %v453 = vld [vmem:[%s1 + $0x20] sm:$0xff]
          %v454 = vld [vmem:[%s1 + $0x28] sm:$0xff]
          %v455 = vld [vmem:[%s1 + $0x30] sm:$0xff]
          %v456 = vld [vmem:[%s1 + $0x38] sm:$0xff]
          %v457 = vld [vmem:[%s1 + $0x40] sm:$0xff]
          %v458 = vld [vmem:[%s1 + $0x48] sm:$0xff]
          %v459 = vld [vmem:[%s1 + $0x50] sm:$0xff]
          %v460 = vld [vmem:[%s1 + $0x58] sm:$0xff]
          %v461 = vld [vmem:[%s1 + $0x60] sm:$0xff]
          %v462 = vld [vmem:[%s1 + $0x68] sm:$0xff]
          %v463 = vld [vmem:[%s1 + $0x70] sm:$0xff]
          %v464 = vld [vmem:[%s1 + $0x78] sm:$0xff]
          %v465 = vld [vmem:[%s2] sm:$0xff]
          %v466 = vld [vmem:[%s2 + $0x8] sm:$0xff]
          %v467 = vld [vmem:[%s2 + $0x10] sm:$0xff]
          %v468 = vld [vmem:[%s2 + $0x18] sm:$0xff]
          %v469 = vld [vmem:[#allocation2] sm:$0x1]
          %470 = vmatprep.subr.mxu0 0.0
          %471 = vmatpush1.msra.mxu0 %v449
          %472 = vmatprep.subr.mxu0 0.0
          %473 = vmatpush1.msra.mxu0 %v450
          %474 = vmatprep.subr.mxu0 0.0
          %475 = vmatpush1.msra.mxu0 %v451
          %476 = vmatprep.subr.mxu0 0.0
          %477 = vmatpush1.msra.mxu0 %v452
          %478 = vmatprep.subr.mxu0 0.0
          %479 = vmatpush1.msra.mxu0 %v453
          %480 = vmatprep.subr.mxu0 0.0
          %481 = vmatpush1.msra.mxu0 %v454
          %482 = vmatprep.subr.mxu0 0.0
          %483 = vmatpush1.msra.mxu0 %v455
          %484 = vmatprep.subr.mxu0 0.0
          %485 = vmatpush1.msra.mxu0 %v456
          %486 = vmatprep.subr.mxu0 0.0
          %487 = vmatpush1.msra.mxu0 %v457
          %488 = vmatprep.subr.mxu0 0.0
          %489 = vmatpush1.msra.mxu0 %v458
          %490 = vmatprep.subr.mxu0 0.0
          %491 = vmatpush1.msra.mxu0 %v459
          %492 = vmatprep.subr.mxu0 0.0
          %493 = vmatpush1.msra.mxu0 %v460
          %494 = vmatprep.subr.mxu0 0.0
          %495 = vmatpush1.msra.mxu0 %v461
          %496 = vmatprep.subr.mxu0 0.0
          %497 = vmatpush1.msra.mxu0 %v462
          %498 = vmatprep.subr.mxu0 0.0
          %499 = vmatpush1.msra.mxu0 %v463
          %500 = vmatprep.subr.mxu0 0.0
          %501 = vmatpush1.msra.mxu0 %v464
          %502 = vmatprep.subr.mxu0 0.0
          %503 = vmatpush1.msra.mxu0 0.0
          %504 = vmatprep.subr.mxu0 0.0
          %505 = vmatpush1.msra.mxu0 0.0
          %506 = vmatprep.subr.mxu0 0.0
          %507 = vmatpush1.msra.mxu0 0.0
          %508 = vmatprep.subr.mxu0 0.0
          %509 = vmatpush1.msra.mxu0 0.0
          %510 = vmatprep.subr.mxu0 0.0
          %511 = vmatpush1.msra.mxu0 0.0
          %512 = vmatprep.subr.mxu0 0.0
          %513 = vmatpush1.msra.mxu0 0.0
          %514 = vmatprep.subr.mxu0 0.0
          %515 = vmatpush1.msra.mxu0 0.0
          %516 = vmatprep.subr.mxu0 0.0
          %517 = vmatpush1.msra.mxu0 0.0
          %518 = vmatprep.subr.mxu0 0.0
          %519 = vmatpush1.msra.mxu0 0.0
          %520 = vmatprep.subr.mxu0 0.0
          %521 = vmatpush1.msra.mxu0 0.0
          %522 = vmatprep.subr.mxu0 0.0
          %523 = vmatpush1.msra.mxu0 0.0
          %524 = vmatprep.subr.mxu0 0.0
          %525 = vmatpush1.msra.mxu0 0.0
          %526 = vmatprep.subr.mxu0 0.0
          %527 = vmatpush1.msra.mxu0 0.0
          %528 = vmatprep.subr.mxu0 0.0
          %529 = vmatpush1.msra.mxu0 0.0
          %530 = vmatprep.subr.mxu0 0.0
          %531 = vmatpush1.msra.mxu0 0.0
          %532 = vmatprep.subr.mxu0 0.0
          %533 = vmatpush1.msra.mxu0 0.0
          %534 = vmatprep.mubr.f32.mxu0 0.0
          %535 = vmatmul.mubr.f32.gmra.mrb[0].mxu0 %v469
          %v536 = vpop.f32.mrb[0].mxu0
          %v537 = vadd.f32 0.0, %v536
          %v538 = vpop.f32.mrb[0].mxu0
          %539 = vdwg.mxu0
          %v540 = vld [vmem:[#allocation3] sm:$0x1]
          %541 = vmatprep.subr.mxu0 0.0
          %542 = vmatpush1.msra.mxu0 %v449
          %543 = vmatprep.subr.mxu0 0.0
          %544 = vmatpush1.msra.mxu0 %v450
          %545 = vmatprep.subr.mxu0 0.0
          %546 = vmatpush1.msra.mxu0 %v451
          %547 = vmatprep.subr.mxu0 0.0
          %548 = vmatpush1.msra.mxu0 %v452
          %549 = vmatprep.subr.mxu0 0.0
          %550 = vmatpush1.msra.mxu0 %v453
          %551 = vmatprep.subr.mxu0 0.0
          %552 = vmatpush1.msra.mxu0 %v454
          %553 = vmatprep.subr.mxu0 0.0
          %554 = vmatpush1.msra.mxu0 %v455
          %555 = vmatprep.subr.mxu0 0.0
          %556 = vmatpush1.msra.mxu0 %v456
          %557 = vmatprep.subr.mxu0 0.0
          %558 = vmatpush1.msra.mxu0 %v457
          %559 = vmatprep.subr.mxu0 0.0
          %560 = vmatpush1.msra.mxu0 %v458
          %561 = vmatprep.subr.mxu0 0.0
          %562 = vmatpush1.msra.mxu0 %v459
          %563 = vmatprep.subr.mxu0 0.0
          %564 = vmatpush1.msra.mxu0 %v460
          %565 = vmatprep.subr.mxu0 0.0
          %566 = vmatpush1.msra.mxu0 %v461
          %567 = vmatprep.subr.mxu0 0.0
          %568 = vmatpush1.msra.mxu0 %v462
          %569 = vmatprep.subr.mxu0 0.0
          %570 = vmatpush1.msra.mxu0 %v463
          %571 = vmatprep.subr.mxu0 0.0
          %572 = vmatpush1.msra.mxu0 %v464
          %573 = vmatprep.subr.mxu0 0.0
          %574 = vmatpush1.msra.mxu0 0.0
          %575 = vmatprep.subr.mxu0 0.0
          %576 = vmatpush1.msra.mxu0 0.0
          %577 = vmatprep.subr.mxu0 0.0
          %578 = vmatpush1.msra.mxu0 0.0
          %579 = vmatprep.subr.mxu0 0.0
          %580 = vmatpush1.msra.mxu0 0.0
          %581 = vmatprep.subr.mxu0 0.0
          %582 = vmatpush1.msra.mxu0 0.0
          %583 = vmatprep.subr.mxu0 0.0
          %584 = vmatpush1.msra.mxu0 0.0
          %585 = vmatprep.subr.mxu0 0.0
          %586 = vmatpush1.msra.mxu0 0.0
          %587 = vmatprep.subr.mxu0 0.0
          %588 = vmatpush1.msra.mxu0 0.0
          %589 = vmatprep.subr.mxu0 0.0
          %590 = vmatpush1.msra.mxu0 0.0
          %591 = vmatprep.subr.mxu0 0.0
          %592 = vmatpush1.msra.mxu0 0.0
          %593 = vmatprep.subr.mxu0 0.0
          %594 = vmatpush1.msra.mxu0 0.0
          %595 = vmatprep.subr.mxu0 0.0
          %596 = vmatpush1.msra.mxu0 0.0
          %597 = vmatprep.subr.mxu0 0.0
          %598 = vmatpush1.msra.mxu0 0.0
          %599 = vmatprep.subr.mxu0 0.0
          %600 = vmatpush1.msra.mxu0 0.0
          %601 = vmatprep.subr.mxu0 0.0
          %602 = vmatpush1.msra.mxu0 0.0
          %603 = vmatprep.subr.mxu0 0.0
          %604 = vmatpush1.msra.mxu0 0.0
          %605 = vmatprep.mubr.f32.mxu0 0.0
          %606 = vmatmul.mubr.f32.gmra.mrb[0].mxu0 %v540
          %v607 = vpop.f32.mrb[0].mxu0
          %v608 = vadd.f32 0.0, %v607
          %v609 = vpop.f32.mrb[0].mxu0
          %610 = vdwg.mxu0
          %v611 = vrcp.pop 1024.0
          %v612 = vmul.f32 %v537, %v611
          %v613 = vmul.f32 %v608, %v611
          %v614 = vmul.f32 %v612, %v612
          %v615 = vsub.f32 %v613, %v614
          %v616 = vadd.f32 %v615, 1e-06
          %v617 = vrsqrt.pop %v616
          %vm618 = vcmask 261120
          %v620 = vsel %vm618, %v612, 0
          %622 = vmatprep.subr.mxu0 0.0
          %623 = vmatpush1.msra.mxu0 %v465
          %624 = vmatprep.subr.mxu0 0.0
          %625 = vmatpush1.msra.mxu0 %v466
          %626 = vmatprep.subr.mxu0 0.0
          %627 = vmatpush1.msra.mxu0 %v467
          %628 = vmatprep.subr.mxu0 0.0
          %629 = vmatpush1.msra.mxu0 %v468
          %630 = vmatprep.subr.mxu0 0.0
          %631 = vmatpush1.msra.mxu0 0.0
          %632 = vmatprep.subr.mxu0 0.0
          %633 = vmatpush1.msra.mxu0 0.0
          %634 = vmatprep.subr.mxu0 0.0
          %635 = vmatpush1.msra.mxu0 0.0
          %636 = vmatprep.subr.mxu0 0.0
          %637 = vmatpush1.msra.mxu0 0.0
          %638 = vmatprep.subr.mxu0 0.0
          %639 = vmatpush1.msra.mxu0 0.0
          %640 = vmatprep.subr.mxu0 0.0
          %641 = vmatpush1.msra.mxu0 0.0
          %642 = vmatprep.subr.mxu0 0.0
          %643 = vmatpush1.msra.mxu0 0.0
          %644 = vmatprep.subr.mxu0 0.0
          %645 = vmatpush1.msra.mxu0 0.0
          %646 = vmatprep.subr.mxu0 0.0
          %647 = vmatpush1.msra.mxu0 0.0
          %648 = vmatprep.subr.mxu0 0.0
          %649 = vmatpush1.msra.mxu0 0.0
          %650 = vmatprep.subr.mxu0 0.0
          %651 = vmatpush1.msra.mxu0 0.0
          %652 = vmatprep.subr.mxu0 0.0
          %653 = vmatpush1.msra.mxu0 0.0
          %654 = vmatprep.subr.mxu0 0.0
          %655 = vmatpush1.msra.mxu0 0.0
          %656 = vmatprep.subr.mxu0 0.0
          %657 = vmatpush1.msra.mxu0 0.0
          %658 = vmatprep.subr.mxu0 0.0
          %659 = vmatpush1.msra.mxu0 0.0
          %660 = vmatprep.subr.mxu0 0.0
          %661 = vmatpush1.msra.mxu0 0.0
          %662 = vmatprep.subr.mxu0 0.0
          %663 = vmatpush1.msra.mxu0 0.0
          %664 = vmatprep.subr.mxu0 0.0
          %665 = vmatpush1.msra.mxu0 0.0
          %666 = vmatprep.subr.mxu0 0.0
          %667 = vmatpush1.msra.mxu0 0.0
          %668 = vmatprep.subr.mxu0 0.0
          %669 = vmatpush1.msra.mxu0 0.0
          %670 = vmatprep.subr.mxu0 0.0
          %671 = vmatpush1.msra.mxu0 0.0
          %672 = vmatprep.subr.mxu0 0.0
          %673 = vmatpush1.msra.mxu0 0.0
          %674 = vmatprep.subr.mxu0 0.0
          %675 = vmatpush1.msra.mxu0 0.0
          %676 = vmatprep.subr.mxu0 0.0
          %677 = vmatpush1.msra.mxu0 0.0
          %678 = vmatprep.subr.mxu0 0.0
          %679 = vmatpush1.msra.mxu0 0.0
          %680 = vmatprep.subr.mxu0 0.0
          %681 = vmatpush1.msra.mxu0 0.0
          %682 = vmatprep.subr.mxu0 0.0
          %683 = vmatpush1.msra.mxu0 0.0
          %684 = vmatprep.subr.mxu0 0.0
          %685 = vmatpush1.msra.mxu0 0.0
          %686 = vmatprep.mubr.f32.mxu0 0.0
          %687 = vmatmul.mubr.f32.gmra.mrb[0].mxu0 %v620
          %v688 = vpop.f32.mrb[0].mxu0
          %v689 = vadd.f32 0.0, %v688
          %v690 = vpop.f32.mrb[0].mxu0
          %691 = vdwg.mxu0
          %v693 = vsel %vm618, %v617, 0
          %695 = vmatprep.subr.mxu0 0.0
          %696 = vmatpush1.msra.mxu0 %v465
          %697 = vmatprep.subr.mxu0 0.0
          %698 = vmatpush1.msra.mxu0 %v466
          %699 = vmatprep.subr.mxu0 0.0
          %700 = vmatpush1.msra.mxu0 %v467
          %701 = vmatprep.subr.mxu0 0.0
          %702 = vmatpush1.msra.mxu0 %v468
          %703 = vmatprep.subr.mxu0 0.0
          %704 = vmatpush1.msra.mxu0 0.0
          %705 = vmatprep.subr.mxu0 0.0
          %706 = vmatpush1.msra.mxu0 0.0
          %707 = vmatprep.subr.mxu0 0.0
          %708 = vmatpush1.msra.mxu0 0.0
          %709 = vmatprep.subr.mxu0 0.0
          %710 = vmatpush1.msra.mxu0 0.0
          %711 = vmatprep.subr.mxu0 0.0
          %712 = vmatpush1.msra.mxu0 0.0
          %713 = vmatprep.subr.mxu0 0.0
          %714 = vmatpush1.msra.mxu0 0.0
          %715 = vmatprep.subr.mxu0 0.0
          %716 = vmatpush1.msra.mxu0 0.0
          %717 = vmatprep.subr.mxu0 0.0
          %718 = vmatpush1.msra.mxu0 0.0
          %719 = vmatprep.subr.mxu0 0.0
          %720 = vmatpush1.msra.mxu0 0.0
          %721 = vmatprep.subr.mxu0 0.0
          %722 = vmatpush1.msra.mxu0 0.0
          %723 = vmatprep.subr.mxu0 0.0
          %724 = vmatpush1.msra.mxu0 0.0
          %725 = vmatprep.subr.mxu0 0.0
          %726 = vmatpush1.msra.mxu0 0.0
          %727 = vmatprep.subr.mxu0 0.0
          %728 = vmatpush1.msra.mxu0 0.0
          %729 = vmatprep.subr.mxu0 0.0
          %730 = vmatpush1.msra.mxu0 0.0
          %731 = vmatprep.subr.mxu0 0.0
          %732 = vmatpush1.msra.mxu0 0.0
          %733 = vmatprep.subr.mxu0 0.0
          %734 = vmatpush1.msra.mxu0 0.0
          %735 = vmatprep.subr.mxu0 0.0
          %736 = vmatpush1.msra.mxu0 0.0
          %737 = vmatprep.subr.mxu0 0.0
          %738 = vmatpush1.msra.mxu0 0.0
          %739 = vmatprep.subr.mxu0 0.0
          %740 = vmatpush1.msra.mxu0 0.0
          %741 = vmatprep.subr.mxu0 0.0
          %742 = vmatpush1.msra.mxu0 0.0
          %743 = vmatprep.subr.mxu0 0.0
          %744 = vmatpush1.msra.mxu0 0.0
          %745 = vmatprep.subr.mxu0 0.0
          %746 = vmatpush1.msra.mxu0 0.0
          %747 = vmatprep.subr.mxu0 0.0
          %748 = vmatpush1.msra.mxu0 0.0
          %749 = vmatprep.subr.mxu0 0.0
          %750 = vmatpush1.msra.mxu0 0.0
          %751 = vmatprep.subr.mxu0 0.0
          %752 = vmatpush1.msra.mxu0 0.0
          %753 = vmatprep.subr.mxu0 0.0
          %754 = vmatpush1.msra.mxu0 0.0
          %755 = vmatprep.subr.mxu0 0.0
          %756 = vmatpush1.msra.mxu0 0.0
          %757 = vmatprep.subr.mxu0 0.0
          %758 = vmatpush1.msra.mxu0 0.0
          %759 = vmatprep.mubr.f32.mxu0 0.0
          %760 = vmatmul.mubr.f32.gmra.mrb[0].mxu0 %v693
          %v761 = vpop.f32.mrb[0].mxu0
          %v762 = vadd.f32 0.0, %v761
          %v763 = vpop.f32.mrb[0].mxu0
          %764 = vdwg.mxu0
          %v765 = vld [vmem:[%s3] sm:$0x1]
          %v766 = vmul.f32 %v765, %v762
          %v767 = vld [vmem:[%s4] sm:$0x1]
          %v768 = vmul.f32 %v689, %v766
          %v769 = vsub.f32 %v767, %v768
          %770 = vst [vmem:[%s288] sm:$0x1] %v766
          %771 = vst [vmem:[%s294] sm:$0x1] %v769
        $region52: #{tpu_custom_call.1} parent=39 // pred_fallthru
          _
        %s772 = sand.u32 %s159, 1
        %s773 = scalar_lea.sflag [#allocation6], %s772
        %s774 = sand.u32 %s159, 1
        %s775 = scalar_lea.vmem [#allocation7], %s774
        %s776 = sand.u32 %s185, 1
        %s777 = scalar_lea.sflag [#allocation9], %s776
        %s778 = sand.u32 %s185, 1
        %s779 = scalar_lea.vmem [#allocation8], %s778
        // Predicated region
        $region53: #{tpu_custom_call.1} parent=39 // pred_check
          %p780 = pneg %p169
        $region54: #{tpu_custom_call.1} parent=39 // pred_check_branch
          %782 = sbr.rel (%p780) target = $region56
        $region55: #{tpu_custom_call.1} parent=39 // pred_region
          %s784 = ssub.s32 16, 16
          %785 = vsyncadd %s773, %s784
          %s786 = smul.addr %s31, 16
          %s787 = scalar_lea.hbm %s5, %s786
          %s789 = sshll.u32 %s775, 4
          %s790 = int_to_ptr.vmem [resolvable:$true] %s789
          %792 = dma.vmem_to_hbm [thread:$0]  %s790, 16, %s787, %s773
        $region56: #{tpu_custom_call.1} parent=39 // pred_fallthru
          _
        // Predicated region
        $region57: #{tpu_custom_call.1} parent=39 // pred_check
          %p793 = pneg %p195
        $region58: #{tpu_custom_call.1} parent=39 // pred_check_branch
          %795 = sbr.rel (%p793) target = $region60
        $region59: #{tpu_custom_call.1} parent=39 // pred_region
          %s797 = ssub.s32 16, 16
          %798 = vsyncadd %s777, %s797
          %s799 = smul.addr %s31, 16
          %s800 = scalar_lea.hbm %s6, %s799
          %s802 = sshll.u32 %s779, 4
          %s803 = int_to_ptr.vmem [resolvable:$true] %s802
          %805 = dma.vmem_to_hbm [thread:$0]  %s803, 16, %s800, %s777
        $region60: #{tpu_custom_call.1} parent=39 // pred_fallthru
          _
      $region40: #{tpu_custom_call.1} parent=5 // pred_fallthru
        _
      %p806 = scmp.le.s32.totalorder 2, %s22
      // Predicated region
      $region61: #{tpu_custom_call.1} parent=5 // pred_check
        %p807 = pneg %p806
      $region62: #{tpu_custom_call.1} parent=5 // pred_check_branch
        %809 = sbr.rel (%p807) target = $region64
      $region63: #{tpu_custom_call.1} parent=5 // pred_region
        %s810 = ssub.s32 %s22, 2
        // Predicated region
        $region65: #{tpu_custom_call.1} parent=63 // pred_check
          %p811 = pneg %p175
        $region66: #{tpu_custom_call.1} parent=63 // pred_check_branch
          %813 = sbr.rel (%p811) target = $region68
        $region67: #{tpu_custom_call.1} parent=63 // pred_region
          %s814 = sand.u32 %s160, 1
          %s815 = scalar_lea.sflag [#allocation6], %s814
          %s816 = sand.u32 %s160, 1
          %s817 = scalar_lea.vmem [#allocation7], %s816
          %818 = dma.done %s815, 16
        $region68: #{tpu_custom_call.1} parent=63 // pred_fallthru
          _
        // Predicated region
        $region69: #{tpu_custom_call.1} parent=63 // pred_check
          %p819 = pneg %p201
        $region70: #{tpu_custom_call.1} parent=63 // pred_check_branch
          %821 = sbr.rel (%p819) target = $region72
        $region71: #{tpu_custom_call.1} parent=63 // pred_region
          %s822 = sand.u32 %s186, 1
          %s823 = scalar_lea.sflag [#allocation9], %s822
          %s824 = sand.u32 %s186, 1
          %s825 = scalar_lea.vmem [#allocation8], %s824
          %826 = dma.done %s823, 16
        $region72: #{tpu_custom_call.1} parent=63 // pred_fallthru
          _
      $region64: #{tpu_custom_call.1} parent=5 // pred_fallthru
        _
    $region6: #{tpu_custom_call.1} parent=1 // loop_footer
      %s26 = sadd.s32 1, %s22
    $region7: #{tpu_custom_call.1} parent=1 // loop_footer_branch
      %21 = sbr.rel target = $region3
    $region8: #{tpu_custom_call.1} parent=1 // loop_exit
      _
    %827 = vsyncpa [#allocation5], 1
    %s828 = scalar_lea.sflag [#allocation5], 1
    %829 = vsyncpa %s828, 1
    %830 = vsyncpa [#allocation6], 1
    %s831 = scalar_lea.sflag [#allocation6], 1
    %832 = vsyncpa %s831, 1
    %833 = vsyncpa [#allocation9], 1
    %s834 = scalar_lea.sflag [#allocation9], 1
    %835 = vsyncpa %s834, 1

</llo_original>
